<compile_context>
chip_gen: v6e
topology: v6e:2x2x1
jax: 0.10.0
libtpu: 0.0.40
codegen_flags: <defaults>
</compile_context>

<pallas_src>
import functools

import jax
import jax.numpy as jnp
from jax.experimental import pallas as pl
from jax.experimental.pallas import tpu as pltpu


def _round_up(x, m):
    return ((x + m - 1) // m) * m


def _clustering_kernel(emb_ref, cent_ref, csq_ref, minval_ref, assign_ref, *,
                       n_valid, k_valid, tm):
    e = emb_ref[...]                        # (TM, D), native dtype (streamed)
    c = cent_ref[...]                       # (K_pad, D), native dtype (resident)
    c_sq = csq_ref[...]                     # (K_pad, 1) f32, hoisted to wrapper

    TM, D = e.shape
    K_pad = c.shape[0]

    # cross[k, m] = c_k . e_m on the MXU.  Both operands contract their last
    # (lane) dim -- the standard q.k^T pattern, no in-kernel transpose.
    cross = jax.lax.dot_general(
        c, e, dimension_numbers=(((1,), (1,)), ((), ())),
        preferred_element_type=jnp.float32)                     # (K_pad, TM)

    # ||e_m||^2 as a lane-dense (1, TM) row via a ones-matvec on the MXU
    # (avoids a cross-lane XLU reduction + relayout; MXU has plenty of slack).
    e32 = e.astype(jnp.float32)
    ones8 = jnp.ones((8, D), dtype=jnp.float32)
    e_sq8 = jax.lax.dot_general(
        ones8, e32 * e32, dimension_numbers=(((1,), (1,)), ((), ())),
        preferred_element_type=jnp.float32)                     # (8, TM)
    e_sq = e_sq8[0:1, :]                                        # (1, TM)

    # ||e||^2 + ||c||^2 - 2 e.c ; clamp tiny negatives from cancellation.
    dist_sq = jnp.maximum(c_sq + e_sq - 2.0 * cross, 0.0)       # (K_pad, TM)

    # Mask padded centroid rows (sublane axis) with +inf.
    k_iota = jax.lax.broadcasted_iota(jnp.int32, (K_pad, TM), 0)
    dist_sq = jnp.where(k_iota < k_valid, dist_sq, jnp.inf)

    # Per-embedding min + first-occurrence argmin over K (sublane reduction),
    # matching torch.argmin tie-breaking.
    min_val = jnp.min(dist_sq, axis=0, keepdims=True)           # (1, TM)
    idx_or_big = jnp.where(dist_sq == min_val, k_iota, jnp.int32(K_pad))
    assign = jnp.min(idx_or_big, axis=0, keepdims=True)         # (1, TM) int32
    assign_ref[...] = assign

    # Per-row loss contribution; zero out columns beyond the real batch size.
    col = pl.program_id(0) * tm + jax.lax.broadcasted_iota(
        jnp.int32, (1, TM), 1)
    minval_ref[...] = jnp.where(col < n_valid, min_val, 0.0)    # (1, TM)


def clustering_loss(embeddings, centroids, *, tm=None):
    """Returns (loss: f32 scalar, assignments: int32 (N,))."""
    N, D = embeddings.shape
    K, D2 = centroids.shape
    assert D == D2
    centroids = centroids.astype(embeddings.dtype)

    itemsize = jnp.dtype(embeddings.dtype).itemsize
    # Sublane granule for the dtype (f32: 8, bf16/f16: 16, 8-bit: 32).
    sub = max(8, 32 // max(1, itemsize))
    k_pad = _round_up(K, sub)

    if tm is None:
        # ~2 MiB per streamed embedding buffer: with double buffering plus the
        # in-kernel f32 temps this stays well inside v5e's 16 MiB default
        # scoped VMEM and v7x's 64 MiB physical / 32 MiB default scoped VMEM.
        bytes_per_row = D * itemsize
        tm = (2 * 1024 * 1024) // max(1, bytes_per_row)
        tm = max(128, min(1024, (tm // 128) * 128))
    tm = max(128, (tm // 128) * 128)   # lane-dense outputs, layout-legal blocks
    # Prefer >= 2 grid steps when the batch allows it (keeps both v7x
    # TensorCores busy via the "parallel" axis); never shrink below 128.
    tm = min(tm, max(128, _round_up((N + 1) // 2, 128)))

    n_pad = _round_up(N, tm)
    n_tiles = n_pad // tm

    if n_pad != N:
        embeddings = jnp.pad(embeddings, ((0, n_pad - N), (0, 0)))
    if k_pad != K:
        centroids = jnp.pad(centroids, ((0, k_pad - K), (0, 0)))

    # Hoisted centroid squared norms (computed once, outside the kernel).
    c_sq = jnp.sum(centroids.astype(jnp.float32) ** 2, axis=1, keepdims=True)

    kernel = functools.partial(_clustering_kernel,
                               n_valid=N, k_valid=K, tm=tm)

    minvals, assign = pl.pallas_call(
        kernel,
        out_shape=(
            jax.ShapeDtypeStruct((1, n_pad), jnp.float32),
            jax.ShapeDtypeStruct((1, n_pad), jnp.int32),
        ),
        grid=(n_tiles,),
        in_specs=[
            pl.BlockSpec((tm, D), lambda i: (i, 0)),       # embeddings (streamed)
            pl.BlockSpec((k_pad, D), lambda i: (0, 0)),    # centroids (resident)
            pl.BlockSpec((k_pad, 1), lambda i: (0, 0)),    # centroid norms
        ],
        out_specs=(
            pl.BlockSpec((1, tm), lambda i: (0, i)),       # per-row min dist^2
            pl.BlockSpec((1, tm), lambda i: (0, i)),       # assignments
        ),
        compiler_params=pltpu.CompilerParams(
            dimension_semantics=("parallel",)),
    )(embeddings, centroids, c_sq)

    loss = jnp.sum(minvals) / jnp.float32(N * D)
    return loss, assign[0, :N]


def _reference(embeddings, centroids):
    """Pure-JAX reference mirroring the PyTorch forward (exact diff form)."""
    d = jnp.sqrt(
        jnp.sum((embeddings[:, None, :] - centroids[None, :, :]) ** 2, axis=-1))
    assign = jnp.argmin(d, axis=1)
    gathered = centroids[assign]
    loss = jnp.mean((embeddings - gathered) ** 2)
    return loss, assign.astype(jnp.int32)


if __name__ == "__main__":
    # Small shapes consistent with the module defaults
    # (numClusters=10, embeddingDim=512), batch of 16 embeddings.
    N, K, D = 16, 10, 512

    key = jax.random.PRNGKey(0)
    k_emb, k_cent = jax.random.split(key)
    embeddings = jax.random.normal(k_emb, (N, D), dtype=jnp.float32)
    centroids = jax.random.normal(k_cent, (K, D), dtype=jnp.float32)  # torch.randn analogue

    loss, assign = clustering_loss(embeddings, centroids)
    jax.block_until_ready((loss, assign))

    ref_loss, ref_assign = _reference(embeddings, centroids)
    assert jnp.allclose(loss, ref_loss, rtol=1e-3, atol=1e-5), (loss, ref_loss)
    assert jnp.array_equal(assign, ref_assign), (assign, ref_assign)

    print("KERNEL_OK")
</pallas_src>

<mosaic_0001>
module attributes {stable_mosaic.version = 11 : i64} {
  func.func @_clustering_kernel(%arg0: i32, %arg1: memref<128x512xf32, #tpu.memory_space<vmem>>, %arg2: memref<16x512xf32, #tpu.memory_space<vmem>>, %arg3: memref<16x1xf32, #tpu.memory_space<vmem>>, %arg4: memref<1x128xf32, #tpu.memory_space<vmem>>, %arg5: memref<1x128xi32, #tpu.memory_space<vmem>>) attributes {dimension_semantics = [#tpu.dimension_semantics<parallel>], iteration_bounds = array<i64: 1>, scalar_prefetch = 0 : i64, scratch_operands = 0 : i64, tpu.core_type = #tpu.core_type<tc>, window_params = [{transform_indices = @transform_0, window_bounds = array<i64: 128, 512>}, {pipeline_mode = #tpu.pipeline_mode<synchronous>, transform_indices = @transform_1, window_bounds = array<i64: 16, 512>}, {pipeline_mode = #tpu.pipeline_mode<synchronous>, transform_indices = @transform_2, window_bounds = array<i64: 16, 1>}, {transform_indices = @transform_3, window_bounds = array<i64: 1, 128>}, {transform_indices = @transform_4, window_bounds = array<i64: 1, 128>}]} {
    %c0 = arith.constant 0 : index
    %c0_0 = arith.constant 0 : index
    %0 = vector.load %arg1[%c0, %c0_0] : memref<128x512xf32, #tpu.memory_space<vmem>>, vector<128x512xf32>
    %c0_1 = arith.constant 0 : index
    %c0_2 = arith.constant 0 : index
    %1 = vector.load %arg2[%c0_1, %c0_2] : memref<16x512xf32, #tpu.memory_space<vmem>>, vector<16x512xf32>
    %c0_3 = arith.constant 0 : index
    %c0_4 = arith.constant 0 : index
    %2 = vector.load %arg3[%c0_3, %c0_4] : memref<16x1xf32, #tpu.memory_space<vmem>>, vector<16x1xf32>
    %cst = arith.constant dense<0.000000e+00> : vector<16x128xf32>
    %3 = tpu.matmul %1, %0, %cst {dimension_numbers = #tpu.dot_dimension_numbers<[1], [1], [0], [0], [0, 0, 1, 0], [], []>} : vector<16x512xf32>, vector<128x512xf32>, vector<16x128xf32> -> vector<16x128xf32>
    %cst_5 = arith.constant 1.000000e+00 : f32
    %4 = vector.broadcast %cst_5 : f32 to vector<8x512xf32>
    %5 = arith.mulf %0, %0 : vector<128x512xf32>
    %cst_6 = arith.constant dense<0.000000e+00> : vector<8x128xf32>
    %6 = tpu.matmul %4, %5, %cst_6 {dimension_numbers = #tpu.dot_dimension_numbers<[1], [1], [0], [0], [0, 0, 1, 0], [], []>} : vector<8x512xf32>, vector<128x512xf32>, vector<8x128xf32> -> vector<8x128xf32>
    %7 = vector.extract_strided_slice %6 {offsets = [0, 0], sizes = [1, 128], strides = [1, 1]} : vector<8x128xf32> to vector<1x128xf32>
    %8 = vector.broadcast %2 : vector<16x1xf32> to vector<16x128xf32>
    %9 = vector.broadcast %7 : vector<1x128xf32> to vector<16x128xf32>
    %10 = arith.addf %8, %9 : vector<16x128xf32>
    %cst_7 = arith.constant 2.000000e+00 : f32
    %11 = vector.broadcast %cst_7 : f32 to vector<16x128xf32>
    %12 = arith.mulf %11, %3 : vector<16x128xf32>
    %13 = arith.subf %10, %12 : vector<16x128xf32>
    %cst_8 = arith.constant 0.000000e+00 : f32
    %14 = vector.broadcast %cst_8 : f32 to vector<16x128xf32>
    %15 = arith.maximumf %13, %14 : vector<16x128xf32>
    %16 = tpu.iota {dimensions = array<i32: 0>} : vector<16x128xi32>
    %c10_i32 = arith.constant 10 : i32
    %17 = vector.broadcast %c10_i32 : i32 to vector<16x128xi32>
    %18 = arith.cmpi slt, %16, %17 : vector<16x128xi32>
    %cst_9 = arith.constant 0x7F800000 : f32
    %19 = vector.broadcast %cst_9 : f32 to vector<16x128xf32>
    %20 = arith.select %18, %15, %19 : vector<16x128xi1>, vector<16x128xf32>
    %cst_10 = arith.constant dense<0x7F800000> : vector<128xf32>
    %21 = vector.multi_reduction <minimumf>, %20, %cst_10 [0] : vector<16x128xf32> to vector<128xf32>
    %22 = vector.shape_cast %21 : vector<128xf32> to vector<1x128xf32>
    %23 = vector.broadcast %22 : vector<1x128xf32> to vector<16x128xf32>
    %24 = arith.cmpf oeq, %20, %23 : vector<16x128xf32>
    %c16_i32 = arith.constant 16 : i32
    %25 = vector.broadcast %c16_i32 : i32 to vector<16x128xi32>
    %26 = arith.select %24, %16, %25 : vector<16x128xi1>, vector<16x128xi32>
    %cst_11 = arith.constant dense<2147483647> : vector<128xi32>
    %27 = vector.multi_reduction <minsi>, %26, %cst_11 [0] : vector<16x128xi32> to vector<128xi32>
    %28 = vector.shape_cast %27 : vector<128xi32> to vector<1x128xi32>
    %c0_12 = arith.constant 0 : index
    %c0_13 = arith.constant 0 : index
    %29 = vector.load %arg5[%c0_12, %c0_13] : memref<1x128xi32, #tpu.memory_space<vmem>>, vector<1x128xi32>
    tpu.vector_store %arg5[%c0_12, %c0_13], %28 {strides = array<i32>} : memref<1x128xi32, #tpu.memory_space<vmem>>, vector<1x128xi32>,
    %c128_i32 = arith.constant 128 : i32
    %30 = arith.muli %arg0, %c128_i32 : i32
    %31 = tpu.iota {dimensions = array<i32: 1>} : vector<1x128xi32>
    %32 = vector.broadcast %30 : i32 to vector<1x128xi32>
    %33 = arith.addi %32, %31 : vector<1x128xi32>
    %c16_i32_14 = arith.constant 16 : i32
    %34 = vector.broadcast %c16_i32_14 : i32 to vector<1x128xi32>
    %35 = arith.cmpi slt, %33, %34 : vector<1x128xi32>
    %cst_15 = arith.constant 0.000000e+00 : f32
    %36 = vector.broadcast %cst_15 : f32 to vector<1x128xf32>
    %37 = arith.select %35, %22, %36 : vector<1x128xi1>, vector<1x128xf32>
    %c0_16 = arith.constant 0 : index
    %c0_17 = arith.constant 0 : index
    %38 = vector.load %arg4[%c0_16, %c0_17] : memref<1x128xf32, #tpu.memory_space<vmem>>, vector<1x128xf32>
    tpu.vector_store %arg4[%c0_16, %c0_17], %37 {strides = array<i32>} : memref<1x128xf32, #tpu.memory_space<vmem>>, vector<1x128xf32>,
    return
  }
  func.func @transform_0(%arg0: i32) -> (i32, i32) {
    %c0_i32 = arith.constant 0 : i32
    %c0_i32_0 = arith.constant 0 : i32
    return %arg0, %c0_i32 : i32, i32
  }
  func.func @transform_1(%arg0: i32) -> (i32, i32) {
    %c0_i32 = arith.constant 0 : i32
    %c0_i32_0 = arith.constant 0 : i32
    %c0_i32_1 = arith.constant 0 : i32
    return %c0_i32, %c0_i32_0 : i32, i32
  }
  func.func @transform_2(%arg0: i32) -> (i32, i32) {
    %c0_i32 = arith.constant 0 : i32
    %c0_i32_0 = arith.constant 0 : i32
    %c0_i32_1 = arith.constant 0 : i32
    return %c0_i32, %c0_i32_0 : i32, i32
  }
  func.func @transform_3(%arg0: i32) -> (i32, i32) {
    %c0_i32 = arith.constant 0 : i32
    %c0_i32_0 = arith.constant 0 : i32
    return %c0_i32, %arg0 : i32, i32
  }
  func.func @transform_4(%arg0: i32) -> (i32, i32) {
    %c0_i32 = arith.constant 0 : i32
    %c0_i32_0 = arith.constant 0 : i32
    return %c0_i32, %arg0 : i32, i32
  }
}

</mosaic_0001>

<llo_original>
// kernel: tpu_custom_call.1
$region0: #{tpu_custom_call.1}
  #allocation0 [shape = 'u32[]', space=smem, size = 0x4, offset = 0x4, fixed_abs, tag = 'smem constant byte address 0x4 - core index']
  #allocation1 [shape = 'u32[144,128]{1,0:T(1,128)}', space=vmem, size = 0x12000, scoped, tag = 'internal scratch']
  %s0 = inlined_call_operand.hbm [shape: f32[128,512], index: 0, kind: input, shape index: {}]
  %s1 = inlined_call_operand.hbm [shape: f32[16,512], index: 1, kind: input, shape index: {}]
  %s2 = inlined_call_operand.vmem [shape: f32[16,1], index: 2, kind: input, shape index: {}]
  %s3 = inlined_call_operand.hbm [shape: f32[1,128], index: 3, kind: output, shape index: {0}]
  %s4 = inlined_call_operand.hbm [shape: s32[1,128], index: 4, kind: output, shape index: {1}]
  %5 = xla_tuple %s3, %s4
  %s6 = sld [smem:[#allocation0]]
  $region38: #{tpu_custom_call.1} parent=0
    _
  %s8 = ssub.s32 1, %s6
  %s9 = scalar_select 0, %s8, %s6
  $region1: #{tpu_custom_call.1} parent=0
    #allocation2 [shape = 'u8[262144]{0}', space=vmem, size = 0x40000, scoped, tag = 'input window, operand 0, single buffered']
    #allocation3 [shape = 's32[1]{0}', space=sflag, size = 0x4, scoped, tag = 'scoped memory for tpu_custom_call.1']
    #allocation4 [shape = 's32[1]{0}', space=sflag, size = 0x4, scoped, tag = 'scoped memory for tpu_custom_call.1']
    #allocation5 [shape = 'u8[32768]{0}', space=vmem, size = 0x8000, scoped, tag = 'input window, operand 1, single buffered']
    #allocation6 [shape = 's32[1]{0}', space=sflag, size = 0x4, scoped, tag = 'scoped memory for tpu_custom_call.1']
    #allocation7 [shape = 'u8[512]{0}', space=vmem, size = 0x400, scoped, tag = 'output window, operand 0, single buffered']
    #allocation8 [shape = 'u8[512]{0}', space=vmem, size = 0x400, scoped, tag = 'output window, operand 1, single buffered']
    #allocation9 [shape = 's32[1]{0}', space=sflag, size = 0x4, scoped, tag = 'scoped memory for tpu_custom_call.1']
    %10 = vsyncpa [#allocation3], 0
    %11 = vsyncpa [#allocation6], 0
    %12 = vsyncpa [#allocation4], 0
    %13 = vsyncpa [#allocation9], 0
    // Predicated region
    $region2: #{tpu_custom_call.1} parent=1 // pred_check
      _
    $region3: #{tpu_custom_call.1} parent=1 // pred_check_branch
      %15 = sbr.rel (0) target = $region5
    $region4: #{tpu_custom_call.1} parent=1 // pred_region
      %s17 = ssub.s32 8192, 8192
      %18 = vsyncadd [#allocation3], %s17
      %s19 = sshll.u32 [#allocation2], 4
      %s20 = int_to_ptr.vmem [resolvable:$true] %s19
      %25 = dma.hbm_to_vmem [thread:$0]  %s0, 8192, %s20, [#allocation3], 512, 512, 32
    $region5: #{tpu_custom_call.1} parent=1 // pred_fallthru
      _
    // Predicated region
    $region6: #{tpu_custom_call.1} parent=1 // pred_check
      _
    $region7: #{tpu_custom_call.1} parent=1 // pred_check_branch
      %27 = sbr.rel (0) target = $region9
    $region8: #{tpu_custom_call.1} parent=1 // pred_region
      %s29 = ssub.s32 1024, 1024
      %30 = vsyncadd [#allocation6], %s29
      %s31 = sshll.u32 [#allocation5], 4
      %s32 = int_to_ptr.vmem [resolvable:$true] %s31
      %37 = dma.hbm_to_vmem [thread:$0]  %s1, 1024, %s32, [#allocation6], 512, 512, 32
    $region9: #{tpu_custom_call.1} parent=1 // pred_fallthru
      _
    // Predicated region
    $region10: #{tpu_custom_call.1} parent=1 // pred_check
      _
    $region11: #{tpu_custom_call.1} parent=1 // pred_check_branch
      %39 = sbr.rel (0) target = $region13
    $region12: #{tpu_custom_call.1} parent=1 // pred_region
      _
    $region13: #{tpu_custom_call.1} parent=1 // pred_fallthru
      _
    // Predicated region
    $region14: #{tpu_custom_call.1} parent=1 // pred_check
      _
    $region15: #{tpu_custom_call.1} parent=1 // pred_check_branch
      %41 = sbr.rel (0) target = $region17
    $region16: #{tpu_custom_call.1} parent=1 // pred_region
      %42 = dma.done [#allocation3], 8192
    $region17: #{tpu_custom_call.1} parent=1 // pred_fallthru
      _
    // Predicated region
    $region18: #{tpu_custom_call.1} parent=1 // pred_check
      _
    $region19: #{tpu_custom_call.1} parent=1 // pred_check_branch
      %44 = sbr.rel (0) target = $region21
    $region20: #{tpu_custom_call.1} parent=1 // pred_region
      %45 = dma.done [#allocation6], 1024
    $region21: #{tpu_custom_call.1} parent=1 // pred_fallthru
      _
    %v46 = vld [vmem:[#allocation2] sm:$0xff]
    %v47 = vld [vmem:[#allocation2 + $0x8] sm:$0xff]
    %v48 = vld [vmem:[#allocation2 + $0x10] sm:$0xff]
    %v49 = vld [vmem:[#allocation2 + $0x18] sm:$0xff]
    %v50 = vld [vmem:[#allocation2 + $0x20] sm:$0xff]
    %v51 = vld [vmem:[#allocation2 + $0x28] sm:$0xff]
    %v52 = vld [vmem:[#allocation2 + $0x30] sm:$0xff]
    %v53 = vld [vmem:[#allocation2 + $0x38] sm:$0xff]
    %v54 = vld [vmem:[#allocation2 + $0x40] sm:$0xff]
    %v55 = vld [vmem:[#allocation2 + $0x48] sm:$0xff]
    %v56 = vld [vmem:[#allocation2 + $0x50] sm:$0xff]
    %v57 = vld [vmem:[#allocation2 + $0x58] sm:$0xff]
    %v58 = vld [vmem:[#allocation2 + $0x60] sm:$0xff]
    %v59 = vld [vmem:[#allocation2 + $0x68] sm:$0xff]
    %v60 = vld [vmem:[#allocation2 + $0x70] sm:$0xff]
    %v61 = vld [vmem:[#allocation2 + $0x78] sm:$0xff]
    %v62 = vld [vmem:[#allocation2 + $0x80] sm:$0xff]
    %v63 = vld [vmem:[#allocation2 + $0x88] sm:$0xff]
    %v64 = vld [vmem:[#allocation2 + $0x90] sm:$0xff]
    %v65 = vld [vmem:[#allocation2 + $0x98] sm:$0xff]
    %v66 = vld [vmem:[#allocation2 + $0xa0] sm:$0xff]
    %v67 = vld [vmem:[#allocation2 + $0xa8] sm:$0xff]
    %v68 = vld [vmem:[#allocation2 + $0xb0] sm:$0xff]
    %v69 = vld [vmem:[#allocation2 + $0xb8] sm:$0xff]
    %v70 = vld [vmem:[#allocation2 + $0xc0] sm:$0xff]
    %v71 = vld [vmem:[#allocation2 + $0xc8] sm:$0xff]
    %v72 = vld [vmem:[#allocation2 + $0xd0] sm:$0xff]
    %v73 = vld [vmem:[#allocation2 + $0xd8] sm:$0xff]
    %v74 = vld [vmem:[#allocation2 + $0xe0] sm:$0xff]
    %v75 = vld [vmem:[#allocation2 + $0xe8] sm:$0xff]
    %v76 = vld [vmem:[#allocation2 + $0xf0] sm:$0xff]
    %v77 = vld [vmem:[#allocation2 + $0xf8] sm:$0xff]
    %v78 = vld [vmem:[#allocation2 + $0x100] sm:$0xff]
    %v79 = vld [vmem:[#allocation2 + $0x108] sm:$0xff]
    %v80 = vld [vmem:[#allocation2 + $0x110] sm:$0xff]
    %v81 = vld [vmem:[#allocation2 + $0x118] sm:$0xff]
    %v82 = vld [vmem:[#allocation2 + $0x120] sm:$0xff]
    %v83 = vld [vmem:[#allocation2 + $0x128] sm:$0xff]
    %v84 = vld [vmem:[#allocation2 + $0x130] sm:$0xff]
    %v85 = vld [vmem:[#allocation2 + $0x138] sm:$0xff]
    %v86 = vld [vmem:[#allocation2 + $0x140] sm:$0xff]
    %v87 = vld [vmem:[#allocation2 + $0x148] sm:$0xff]
    %v88 = vld [vmem:[#allocation2 + $0x150] sm:$0xff]
    %v89 = vld [vmem:[#allocation2 + $0x158] sm:$0xff]
    %v90 = vld [vmem:[#allocation2 + $0x160] sm:$0xff]
    %v91 = vld [vmem:[#allocation2 + $0x168] sm:$0xff]
    %v92 = vld [vmem:[#allocation2 + $0x170] sm:$0xff]
    %v93 = vld [vmem:[#allocation2 + $0x178] sm:$0xff]
    %v94 = vld [vmem:[#allocation2 + $0x180] sm:$0xff]
    %v95 = vld [vmem:[#allocation2 + $0x188] sm:$0xff]
    %v96 = vld [vmem:[#allocation2 + $0x190] sm:$0xff]
    %v97 = vld [vmem:[#allocation2 + $0x198] sm:$0xff]
    %v98 = vld [vmem:[#allocation2 + $0x1a0] sm:$0xff]
    %v99 = vld [vmem:[#allocation2 + $0x1a8] sm:$0xff]
    %v100 = vld [vmem:[#allocation2 + $0x1b0] sm:$0xff]
    %v101 = vld [vmem:[#allocation2 + $0x1b8] sm:$0xff]
    %v102 = vld [vmem:[#allocation2 + $0x1c0] sm:$0xff]
    %v103 = vld [vmem:[#allocation2 + $0x1c8] sm:$0xff]
    %v104 = vld [vmem:[#allocation2 + $0x1d0] sm:$0xff]
    %v105 = vld [vmem:[#allocation2 + $0x1d8] sm:$0xff]
    %v106 = vld [vmem:[#allocation2 + $0x1e0] sm:$0xff]
    %v107 = vld [vmem:[#allocation2 + $0x1e8] sm:$0xff]
    %v108 = vld [vmem:[#allocation2 + $0x1f0] sm:$0xff]
    %v109 = vld [vmem:[#allocation2 + $0x1f8] sm:$0xff]
    %v110 = vld [vmem:[#allocation5] sm:$0xff]
    %v111 = vld [vmem:[#allocation5 + $0x8] sm:$0xff]
    %v112 = vld [vmem:[#allocation5 + $0x10] sm:$0xff]
    %v113 = vld [vmem:[#allocation5 + $0x18] sm:$0xff]
    %v114 = vld [vmem:[#allocation5 + $0x20] sm:$0xff]
    %v115 = vld [vmem:[#allocation5 + $0x28] sm:$0xff]
    %v116 = vld [vmem:[#allocation5 + $0x30] sm:$0xff]
    %v117 = vld [vmem:[#allocation5 + $0x38] sm:$0xff]
    %v118 = vld [vmem:[%s2] sm:$0xff]
    %v119 = vld [vmem:[%s2 + $0x8] sm:$0xff]
    %120 = vmatprep.subr.mxu0 %v107
    %121 = vmatpush1.xpose.msra.mxu0 %v106
    %122 = vmatprep.subr.mxu0 %v103
    %123 = vmatpush1.xpose.msra.mxu0 %v102
    %124 = vmatprep.subr.mxu0 %v99
    %125 = vmatpush1.xpose.msra.mxu0 %v98
    %126 = vmatprep.subr.mxu0 %v95
    %127 = vmatpush1.xpose.msra.mxu0 %v94
    %128 = vmatprep.subr.mxu0 %v91
    %129 = vmatpush1.xpose.msra.mxu0 %v90
    %130 = vmatprep.subr.mxu0 %v87
    %131 = vmatpush1.xpose.msra.mxu0 %v86
    %132 = vmatprep.subr.mxu0 %v83
    %133 = vmatpush1.xpose.msra.mxu0 %v82
    %134 = vmatprep.subr.mxu0 %v79
    %135 = vmatpush1.xpose.msra.mxu0 %v78
    %136 = vmatprep.subr.mxu0 %v75
    %137 = vmatpush1.xpose.msra.mxu0 %v74
    %138 = vmatprep.subr.mxu0 %v71
    %139 = vmatpush1.xpose.msra.mxu0 %v70
    %140 = vmatprep.subr.mxu0 %v67
    %141 = vmatpush1.xpose.msra.mxu0 %v66
    %142 = vmatprep.subr.mxu0 %v63
    %143 = vmatpush1.xpose.msra.mxu0 %v62
    %144 = vmatprep.subr.mxu0 %v59
    %145 = vmatpush1.xpose.msra.mxu0 %v58
    %146 = vmatprep.subr.mxu0 %v55
    %147 = vmatpush1.xpose.msra.mxu0 %v54
    %148 = vmatprep.subr.mxu0 %v51
    %149 = vmatpush1.xpose.msra.mxu0 %v50
    %150 = vmatprep.subr.mxu0 %v47
    %151 = vmatpush1.xpose.msra.mxu0 %v46
    %152 = vmatprep.subr.mxu0 0.0
    %153 = vmatpush2.xpose.msra.mxu0 0.0
    %154 = vmatprep.subr.mxu0 0.0
    %155 = vmatpush2.xpose.msra.mxu0 0.0
    %156 = vmatprep.subr.mxu0 0.0
    %157 = vmatpush2.xpose.msra.mxu0 0.0
    %158 = vmatprep.subr.mxu0 0.0
    %159 = vmatpush2.xpose.msra.mxu0 0.0
    %160 = vmatprep.subr.mxu0 0.0
    %161 = vmatpush2.xpose.msra.mxu0 0.0
    %162 = vmatprep.subr.mxu0 0.0
    %163 = vmatpush2.xpose.msra.mxu0 0.0
    %164 = vmatprep.subr.mxu0 0.0
    %165 = vmatpush2.xpose.msra.mxu0 0.0
    %166 = vmatprep.subr.mxu0 0.0
    %167 = vmatpush2.xpose.msra.mxu0 0.0
    %168 = vmatprep.subr.mxu0 0.0
    %169 = vmatpush2.xpose.msra.mxu0 0.0
    %170 = vmatprep.subr.mxu0 0.0
    %171 = vmatpush2.xpose.msra.mxu0 0.0
    %172 = vmatprep.subr.mxu0 0.0
    %173 = vmatpush2.xpose.msra.mxu0 0.0
    %174 = vmatprep.subr.mxu0 0.0
    %175 = vmatpush2.xpose.msra.mxu0 0.0
    %176 = vmatprep.subr.mxu0 0.0
    %177 = vmatpush2.xpose.msra.mxu0 0.0
    %178 = vmatprep.subr.mxu0 0.0
    %179 = vmatpush2.xpose.msra.mxu0 0.0
    %180 = vmatprep.subr.mxu0 0.0
    %181 = vmatpush2.xpose.msra.mxu0 0.0
    %182 = vmatprep.subr.mxu0 0.0
    %183 = vmatpush2.xpose.msra.mxu0 0.0
    %184 = vmatprep.mubr.f32.mxu0 %v111
    %185 = vmatmul.mubr.f32.gmra.mxu0 %v110
    %v186 = vpop.f32.mrf.mxu0
    %v187 = vadd.f32 0.0, %v186
    %v188 = vpop.f32.mrf.mxu0
    %189 = vmatprep.mubr.f32.mxu0 %v115
    %190 = vmatmul.mubr.f32.gmra.mxu0 %v114
    %v191 = vpop.f32.mrf.mxu0
    %v192 = vadd.f32 0.0, %v191
    %v193 = vpop.f32.mrf.mxu0
    %194 = vdwg.mxu0
    %195 = vmatprep.subr.mxu0 %v109
    %196 = vmatpush1.xpose.msra.mxu0 %v108
    %197 = vmatprep.subr.mxu0 %v105
    %198 = vmatpush1.xpose.msra.mxu0 %v104
    %199 = vmatprep.subr.mxu0 %v101
    %200 = vmatpush1.xpose.msra.mxu0 %v100
    %201 = vmatprep.subr.mxu0 %v97
    %202 = vmatpush1.xpose.msra.mxu0 %v96
    %203 = vmatprep.subr.mxu0 %v93
    %204 = vmatpush1.xpose.msra.mxu0 %v92
    %205 = vmatprep.subr.mxu0 %v89
    %206 = vmatpush1.xpose.msra.mxu0 %v88
    %207 = vmatprep.subr.mxu0 %v85
    %208 = vmatpush1.xpose.msra.mxu0 %v84
    %209 = vmatprep.subr.mxu0 %v81
    %210 = vmatpush1.xpose.msra.mxu0 %v80
    %211 = vmatprep.subr.mxu0 %v77
    %212 = vmatpush1.xpose.msra.mxu0 %v76
    %213 = vmatprep.subr.mxu0 %v73
    %214 = vmatpush1.xpose.msra.mxu0 %v72
    %215 = vmatprep.subr.mxu0 %v69
    %216 = vmatpush1.xpose.msra.mxu0 %v68
    %217 = vmatprep.subr.mxu0 %v65
    %218 = vmatpush1.xpose.msra.mxu0 %v64
    %219 = vmatprep.subr.mxu0 %v61
    %220 = vmatpush1.xpose.msra.mxu0 %v60
    %221 = vmatprep.subr.mxu0 %v57
    %222 = vmatpush1.xpose.msra.mxu0 %v56
    %223 = vmatprep.subr.mxu0 %v53
    %224 = vmatpush1.xpose.msra.mxu0 %v52
    %225 = vmatprep.subr.mxu0 %v49
    %226 = vmatpush1.xpose.msra.mxu0 %v48
    %227 = vmatprep.subr.mxu0 0.0
    %228 = vmatpush2.xpose.msra.mxu0 0.0
    %229 = vmatprep.subr.mxu0 0.0
    %230 = vmatpush2.xpose.msra.mxu0 0.0
    %231 = vmatprep.subr.mxu0 0.0
    %232 = vmatpush2.xpose.msra.mxu0 0.0
    %233 = vmatprep.subr.mxu0 0.0
    %234 = vmatpush2.xpose.msra.mxu0 0.0
    %235 = vmatprep.subr.mxu0 0.0
    %236 = vmatpush2.xpose.msra.mxu0 0.0
    %237 = vmatprep.subr.mxu0 0.0
    %238 = vmatpush2.xpose.msra.mxu0 0.0
    %239 = vmatprep.subr.mxu0 0.0
    %240 = vmatpush2.xpose.msra.mxu0 0.0
    %241 = vmatprep.subr.mxu0 0.0
    %242 = vmatpush2.xpose.msra.mxu0 0.0
    %243 = vmatprep.subr.mxu0 0.0
    %244 = vmatpush2.xpose.msra.mxu0 0.0
    %245 = vmatprep.subr.mxu0 0.0
    %246 = vmatpush2.xpose.msra.mxu0 0.0
    %247 = vmatprep.subr.mxu0 0.0
    %248 = vmatpush2.xpose.msra.mxu0 0.0
    %249 = vmatprep.subr.mxu0 0.0
    %250 = vmatpush2.xpose.msra.mxu0 0.0
    %251 = vmatprep.subr.mxu0 0.0
    %252 = vmatpush2.xpose.msra.mxu0 0.0
    %253 = vmatprep.subr.mxu0 0.0
    %254 = vmatpush2.xpose.msra.mxu0 0.0
    %255 = vmatprep.subr.mxu0 0.0
    %256 = vmatpush2.xpose.msra.mxu0 0.0
    %257 = vmatprep.subr.mxu0 0.0
    %258 = vmatpush2.xpose.msra.mxu0 0.0
    %259 = vmatprep.mubr.f32.mxu0 %v113
    %260 = vmatmul.mubr.f32.gmra.mxu0 %v112
    %v261 = vpop.f32.mrf.mxu0
    %v262 = vadd.f32 %v187, %v261
    %v263 = vpop.f32.mrf.mxu0
    %264 = vmatprep.mubr.f32.mxu0 %v117
    %265 = vmatmul.mubr.f32.gmra.mxu0 %v116
    %v266 = vpop.f32.mrf.mxu0
    %v267 = vadd.f32 %v192, %v266
    %v268 = vpop.f32.mrf.mxu0
    %269 = vdwg.mxu0
    %v270 = vmul.f32 %v46, %v46
    %v271 = vmul.f32 %v47, %v47
    %v272 = vmul.f32 %v48, %v48
    %v273 = vmul.f32 %v49, %v49
    %v274 = vmul.f32 %v50, %v50
    %v275 = vmul.f32 %v51, %v51
    %v276 = vmul.f32 %v52, %v52
    %v277 = vmul.f32 %v53, %v53
    %v278 = vmul.f32 %v54, %v54
    %v279 = vmul.f32 %v55, %v55
    %v280 = vmul.f32 %v56, %v56
    %v281 = vmul.f32 %v57, %v57
    %v282 = vmul.f32 %v58, %v58
    %v283 = vmul.f32 %v59, %v59
    %v284 = vmul.f32 %v60, %v60
    %v285 = vmul.f32 %v61, %v61
    %v286 = vmul.f32 %v62, %v62
    %v287 = vmul.f32 %v63, %v63
    %v288 = vmul.f32 %v64, %v64
    %v289 = vmul.f32 %v65, %v65
    %v290 = vmul.f32 %v66, %v66
    %v291 = vmul.f32 %v67, %v67
    %v292 = vmul.f32 %v68, %v68
    %v293 = vmul.f32 %v69, %v69
    %v294 = vmul.f32 %v70, %v70
    %v295 = vmul.f32 %v71, %v71
    %v296 = vmul.f32 %v72, %v72
    %v297 = vmul.f32 %v73, %v73
    %v298 = vmul.f32 %v74, %v74
    %v299 = vmul.f32 %v75, %v75
    %v300 = vmul.f32 %v76, %v76
    %v301 = vmul.f32 %v77, %v77
    %v302 = vmul.f32 %v78, %v78
    %v303 = vmul.f32 %v79, %v79
    %v304 = vmul.f32 %v80, %v80
    %v305 = vmul.f32 %v81, %v81
    %v306 = vmul.f32 %v82, %v82
    %v307 = vmul.f32 %v83, %v83
    %v308 = vmul.f32 %v84, %v84
    %v309 = vmul.f32 %v85, %v85
    %v310 = vmul.f32 %v86, %v86
    %v311 = vmul.f32 %v87, %v87
    %v312 = vmul.f32 %v88, %v88
    %v313 = vmul.f32 %v89, %v89
    %v314 = vmul.f32 %v90, %v90
    %v315 = vmul.f32 %v91, %v91
    %v316 = vmul.f32 %v92, %v92
    %v317 = vmul.f32 %v93, %v93
    %v318 = vmul.f32 %v94, %v94
    %v319 = vmul.f32 %v95, %v95
    %v320 = vmul.f32 %v96, %v96
    %v321 = vmul.f32 %v97, %v97
    %v322 = vmul.f32 %v98, %v98
    %v323 = vmul.f32 %v99, %v99
    %v324 = vmul.f32 %v100, %v100
    %v325 = vmul.f32 %v101, %v101
    %v326 = vmul.f32 %v102, %v102
    %v327 = vmul.f32 %v103, %v103
    %v328 = vmul.f32 %v104, %v104
    %v329 = vmul.f32 %v105, %v105
    %v330 = vmul.f32 %v106, %v106
    %v331 = vmul.f32 %v107, %v107
    %v332 = vmul.f32 %v108, %v108
    %v333 = vmul.f32 %v109, %v109
    %334 = vmatprep.subr.mxu0 %v331
    %335 = vmatpush1.xpose.msra.mxu0 %v330
    %336 = vmatprep.subr.mxu0 %v327
    %337 = vmatpush1.xpose.msra.mxu0 %v326
    %338 = vmatprep.subr.mxu0 %v323
    %339 = vmatpush1.xpose.msra.mxu0 %v322
    %340 = vmatprep.subr.mxu0 %v319
    %341 = vmatpush1.xpose.msra.mxu0 %v318
    %342 = vmatprep.subr.mxu0 %v315
    %343 = vmatpush1.xpose.msra.mxu0 %v314
    %344 = vmatprep.subr.mxu0 %v311
    %345 = vmatpush1.xpose.msra.mxu0 %v310
    %346 = vmatprep.subr.mxu0 %v307
    %347 = vmatpush1.xpose.msra.mxu0 %v306
    %348 = vmatprep.subr.mxu0 %v303
    %349 = vmatpush1.xpose.msra.mxu0 %v302
    %350 = vmatprep.subr.mxu0 %v299
    %351 = vmatpush1.xpose.msra.mxu0 %v298
    %352 = vmatprep.subr.mxu0 %v295
    %353 = vmatpush1.xpose.msra.mxu0 %v294
    %354 = vmatprep.subr.mxu0 %v291
    %355 = vmatpush1.xpose.msra.mxu0 %v290
    %356 = vmatprep.subr.mxu0 %v287
    %357 = vmatpush1.xpose.msra.mxu0 %v286
    %358 = vmatprep.subr.mxu0 %v283
    %359 = vmatpush1.xpose.msra.mxu0 %v282
    %360 = vmatprep.subr.mxu0 %v279
    %361 = vmatpush1.xpose.msra.mxu0 %v278
    %362 = vmatprep.subr.mxu0 %v275
    %363 = vmatpush1.xpose.msra.mxu0 %v274
    %364 = vmatprep.subr.mxu0 %v271
    %365 = vmatpush1.xpose.msra.mxu0 %v270
    %366 = vmatprep.subr.mxu0 0.0
    %367 = vmatpush2.xpose.msra.mxu0 0.0
    %368 = vmatprep.subr.mxu0 0.0
    %369 = vmatpush2.xpose.msra.mxu0 0.0
    %370 = vmatprep.subr.mxu0 0.0
    %371 = vmatpush2.xpose.msra.mxu0 0.0
    %372 = vmatprep.subr.mxu0 0.0
    %373 = vmatpush2.xpose.msra.mxu0 0.0
    %374 = vmatprep.subr.mxu0 0.0
    %375 = vmatpush2.xpose.msra.mxu0 0.0
    %376 = vmatprep.subr.mxu0 0.0
    %377 = vmatpush2.xpose.msra.mxu0 0.0
    %378 = vmatprep.subr.mxu0 0.0
    %379 = vmatpush2.xpose.msra.mxu0 0.0
    %380 = vmatprep.subr.mxu0 0.0
    %381 = vmatpush2.xpose.msra.mxu0 0.0
    %382 = vmatprep.subr.mxu0 0.0
    %383 = vmatpush2.xpose.msra.mxu0 0.0
    %384 = vmatprep.subr.mxu0 0.0
    %385 = vmatpush2.xpose.msra.mxu0 0.0
    %386 = vmatprep.subr.mxu0 0.0
    %387 = vmatpush2.xpose.msra.mxu0 0.0
    %388 = vmatprep.subr.mxu0 0.0
    %389 = vmatpush2.xpose.msra.mxu0 0.0
    %390 = vmatprep.subr.mxu0 0.0
    %391 = vmatpush2.xpose.msra.mxu0 0.0
    %392 = vmatprep.subr.mxu0 0.0
    %393 = vmatpush2.xpose.msra.mxu0 0.0
    %394 = vmatprep.subr.mxu0 0.0
    %395 = vmatpush2.xpose.msra.mxu0 0.0
    %396 = vmatprep.subr.mxu0 0.0
    %397 = vmatpush2.xpose.msra.mxu0 0.0
    %398 = vmatprep.mubr.f32.mxu0 1.0
    %399 = vmatmul.mubr.f32.gmra.mxu0 1.0
    %v400 = vpop.f32.mrf.mxu0
    %v401 = vadd.f32 0.0, %v400
    %v402 = vpop.f32.mrf.mxu0
    %403 = vdwg.mxu0
    %404 = vmatprep.subr.mxu0 %v333
    %405 = vmatpush1.xpose.msra.mxu0 %v332
    %406 = vmatprep.subr.mxu0 %v329
    %407 = vmatpush1.xpose.msra.mxu0 %v328
    %408 = vmatprep.subr.mxu0 %v325
    %409 = vmatpush1.xpose.msra.mxu0 %v324
    %410 = vmatprep.subr.mxu0 %v321
    %411 = vmatpush1.xpose.msra.mxu0 %v320
    %412 = vmatprep.subr.mxu0 %v317
    %413 = vmatpush1.xpose.msra.mxu0 %v316
    %414 = vmatprep.subr.mxu0 %v313
    %415 = vmatpush1.xpose.msra.mxu0 %v312
    %416 = vmatprep.subr.mxu0 %v309
    %417 = vmatpush1.xpose.msra.mxu0 %v308
    %418 = vmatprep.subr.mxu0 %v305
    %419 = vmatpush1.xpose.msra.mxu0 %v304
    %420 = vmatprep.subr.mxu0 %v301
    %421 = vmatpush1.xpose.msra.mxu0 %v300
    %422 = vmatprep.subr.mxu0 %v297
    %423 = vmatpush1.xpose.msra.mxu0 %v296
    %424 = vmatprep.subr.mxu0 %v293
    %425 = vmatpush1.xpose.msra.mxu0 %v292
    %426 = vmatprep.subr.mxu0 %v289
    %427 = vmatpush1.xpose.msra.mxu0 %v288
    %428 = vmatprep.subr.mxu0 %v285
    %429 = vmatpush1.xpose.msra.mxu0 %v284
    %430 = vmatprep.subr.mxu0 %v281
    %431 = vmatpush1.xpose.msra.mxu0 %v280
    %432 = vmatprep.subr.mxu0 %v277
    %433 = vmatpush1.xpose.msra.mxu0 %v276
    %434 = vmatprep.subr.mxu0 %v273
    %435 = vmatpush1.xpose.msra.mxu0 %v272
    %436 = vmatprep.subr.mxu0 0.0
    %437 = vmatpush2.xpose.msra.mxu0 0.0
    %438 = vmatprep.subr.mxu0 0.0
    %439 = vmatpush2.xpose.msra.mxu0 0.0
    %440 = vmatprep.subr.mxu0 0.0
    %441 = vmatpush2.xpose.msra.mxu0 0.0
    %442 = vmatprep.subr.mxu0 0.0
    %443 = vmatpush2.xpose.msra.mxu0 0.0
    %444 = vmatprep.subr.mxu0 0.0
    %445 = vmatpush2.xpose.msra.mxu0 0.0
    %446 = vmatprep.subr.mxu0 0.0
    %447 = vmatpush2.xpose.msra.mxu0 0.0
    %448 = vmatprep.subr.mxu0 0.0
    %449 = vmatpush2.xpose.msra.mxu0 0.0
    %450 = vmatprep.subr.mxu0 0.0
    %451 = vmatpush2.xpose.msra.mxu0 0.0
    %452 = vmatprep.subr.mxu0 0.0
    %453 = vmatpush2.xpose.msra.mxu0 0.0
    %454 = vmatprep.subr.mxu0 0.0
    %455 = vmatpush2.xpose.msra.mxu0 0.0
    %456 = vmatprep.subr.mxu0 0.0
    %457 = vmatpush2.xpose.msra.mxu0 0.0
    %458 = vmatprep.subr.mxu0 0.0
    %459 = vmatpush2.xpose.msra.mxu0 0.0
    %460 = vmatprep.subr.mxu0 0.0
    %461 = vmatpush2.xpose.msra.mxu0 0.0
    %462 = vmatprep.subr.mxu0 0.0
    %463 = vmatpush2.xpose.msra.mxu0 0.0
    %464 = vmatprep.subr.mxu0 0.0
    %465 = vmatpush2.xpose.msra.mxu0 0.0
    %466 = vmatprep.subr.mxu0 0.0
    %467 = vmatpush2.xpose.msra.mxu0 0.0
    %468 = vmatprep.mubr.f32.mxu0 1.0
    %469 = vmatmul.mubr.f32.gmra.mxu0 1.0
    %v470 = vpop.f32.mrf.mxu0
    %v471 = vadd.f32 %v401, %v470
    %v472 = vpop.f32.mrf.mxu0
    %473 = vdwg.mxu0
    %475 = vset.pattern.permute.xlu0 0
    %476 = vperm.xlu0 %475, %v118
    %v477 = vpop.permute.xlu0 %476
    %480 = vset.pattern.permute.xlu0 0
    %481 = vperm.xlu0 %480, %v119
    %v482 = vpop.permute.xlu0 %481
    %v484 = vlaneseq
    %v485 = vshrl.u32 %v484, 7
    %v486 = vsub.s32 0, %v485
    %v487 = vrot.slane %v471, %v486
    %v488 = vadd.f32 %v477, %v487
    %v489 = vadd.f32 %v482, %v487
    %v490 = vmul.f32 %v262, 2.0
    %v491 = vmul.f32 %v267, 2.0
    %v492 = vsub.f32 %v488, %v490
    %v493 = vsub.f32 %v489, %v491
    %v494 = vmax.f32 %v492, 0.0
    %v495 = vmax.f32 %v493, 0.0
    %v496 = vlaneseq
    %v497 = vshrl.u32 %v496, 7
    %v498 = vadd.s32 %v497, 8
    %vm499 = vcmp.lt.s32.totalorder %v497, 10
    %vm500 = vcmp.lt.s32.totalorder %v498, 10
    %v501 = vsel %vm499, %v494, inf
    %v502 = vsel %vm500, %v495, inf
    %v503 = vmin.f32 %v501, %v502
    %v504 = vrot.slane %v503, 4
    %v505 = vmin.f32 %v503, %v504
    %v506 = vrot.slane %v505, 2
    %v507 = vmin.f32 %v505, %v506
    %v508 = vrot.slane %v507, 1
    %v509 = vmin.f32 %v507, %v508
    %vm510 = vcmp.eq.f32.partialorder %v501, %v509
    %vm511 = vcmp.eq.f32.partialorder %v502, %v509
    %v512 = vsel %vm510, %v497, 16
    %v513 = vsel %vm511, %v498, 16
    %vm514 = vcmp.lt.s32.totalorder %v512, %v513
    %v515 = vsel %vm514, %v512, %v513
    %v516 = vrot.slane %v515, 4
    %vm517 = vcmp.lt.s32.totalorder %v515, %v516
    %v518 = vsel %vm517, %v515, %v516
    %v519 = vrot.slane %v518, 2
    %vm520 = vcmp.lt.s32.totalorder %v518, %v519
    %v521 = vsel %vm520, %v518, %v519
    %v522 = vrot.slane %v521, 1
    %vm523 = vcmp.lt.s32.totalorder %v521, %v522
    %v524 = vsel %vm523, %v521, %v522
    %525 = vst [vmem:[#allocation8] sm:$0x1] %v524
    %s526 = smul.u32 0, 128
    %v527 = vlaneseq
    %v528 = vand.u32 %v527, 127
    %v529 = vstv %s526
    %v530 = vadd.s32 %v529, %v528
    %vm531 = vcmp.lt.s32.totalorder %v530, 16
    %v532 = vsel %vm531, %v509, 0.0
    %533 = vst [vmem:[#allocation7] sm:$0x1] %v532
    // Predicated region
    $region22: #{tpu_custom_call.1} parent=1 // pred_check
      _
    $region23: #{tpu_custom_call.1} parent=1 // pred_check_branch
      %535 = sbr.rel (0) target = $region25
    $region24: #{tpu_custom_call.1} parent=1 // pred_region
      %s537 = ssub.s32 16, 16
      %538 = vsyncadd [#allocation4], %s537
      %s540 = sshll.u32 [#allocation7], 4
      %s541 = int_to_ptr.vmem [resolvable:$true] %s540
      %543 = dma.vmem_to_hbm [thread:$0]  %s541, 16, %s3, [#allocation4]
    $region25: #{tpu_custom_call.1} parent=1 // pred_fallthru
      _
    // Predicated region
    $region26: #{tpu_custom_call.1} parent=1 // pred_check
      _
    $region27: #{tpu_custom_call.1} parent=1 // pred_check_branch
      %545 = sbr.rel (0) target = $region29
    $region28: #{tpu_custom_call.1} parent=1 // pred_region
      %s547 = ssub.s32 16, 16
      %548 = vsyncadd [#allocation9], %s547
      %s550 = sshll.u32 [#allocation8], 4
      %s551 = int_to_ptr.vmem [resolvable:$true] %s550
      %553 = dma.vmem_to_hbm [thread:$0]  %s551, 16, %s4, [#allocation9]
    $region29: #{tpu_custom_call.1} parent=1 // pred_fallthru
      _
    // Predicated region
    $region30: #{tpu_custom_call.1} parent=1 // pred_check
      _
    $region31: #{tpu_custom_call.1} parent=1 // pred_check_branch
      %555 = sbr.rel (0) target = $region33
    $region32: #{tpu_custom_call.1} parent=1 // pred_region
      %556 = dma.done [#allocation4], 16
    $region33: #{tpu_custom_call.1} parent=1 // pred_fallthru
      _
    // Predicated region
    $region34: #{tpu_custom_call.1} parent=1 // pred_check
      _
    $region35: #{tpu_custom_call.1} parent=1 // pred_check_branch
      %558 = sbr.rel (0) target = $region37
    $region36: #{tpu_custom_call.1} parent=1 // pred_region
      %559 = dma.done [#allocation9], 16
    $region37: #{tpu_custom_call.1} parent=1 // pred_fallthru
      _
    %560 = vsyncpa [#allocation3], 1
    %561 = vsyncpa [#allocation6], 1
    %562 = vsyncpa [#allocation4], 1
    %563 = vsyncpa [#allocation9], 1

</llo_original>
